<compile_context>
chip_gen: v5e
topology: v5e:2x2
jax: 0.10.0
libtpu: 0.0.40
codegen_flags: <defaults>
</compile_context>

<pallas_src>
import functools

import jax
import jax.numpy as jnp
from jax.experimental import pallas as pl
from jax.experimental.pallas import tpu as pltpu


# -----------------------------------------------------------------------------
# Kernel
# -----------------------------------------------------------------------------
def _bias_free_ln_kernel(x_ref, w_ref, o_ref, *, eps):
    """One (rows, C) strip: bias-free layernorm over the channel (lane) axis."""
    x = x_ref[...].astype(jnp.float32)                            # (TM, C)
    mu = jnp.mean(x, axis=-1, keepdims=True)
    xc = x - mu
    var = jnp.mean(xc * xc, axis=-1, keepdims=True)               # unbiased=False
    inv = jax.lax.rsqrt(var + eps)                                # EUP rsqrt, no divide
    y = x * inv * w_ref[...].astype(jnp.float32)                  # NO mean-subtraction, NO bias
    o_ref[...] = y.astype(o_ref.dtype)


# -----------------------------------------------------------------------------
# Wrapper
# -----------------------------------------------------------------------------
def _pick_block_rows(n_rows, n_cols, itemsize, vmem_budget_bytes=8 * 1024 * 1024):
    """Largest 8-multiple row strip such that ~4 live tiles (input + output,
    each double-buffered) stay comfortably under the scoped-VMEM default on
    every generation (v5e/v6e: 32 MiB scoped, v7x: 64 MiB physical)."""
    rows = vmem_budget_bytes // max(1, 4 * n_cols * itemsize)
    rows = max(8, min(1024, rows))
    rows = (rows // 8) * 8
    padded = ((n_rows + 7) // 8) * 8
    if rows >= padded:
        # Whole problem fits in one block: split into two strips so the
        # "parallel" grid axis can still shard across v7x's 2 TensorCores.
        rows = ((padded // 2 + 7) // 8) * 8 if padded > 16 else padded
    return max(8, min(rows, padded))


def bias_free_layernorm(x, weight, *, eps=1e-5, block_rows=None):
    """BiasFree_LayerNorm forward.  x: (..., C), weight: (C,)."""
    lead, C = x.shape[:-1], x.shape[-1]
    n_rows = 1
    for d in lead:
        n_rows *= int(d)
    x2d = x.reshape(n_rows, C)
    w2d = weight.reshape(1, C)

    if block_rows is None:
        block_rows = _pick_block_rows(n_rows, C, jnp.dtype(x.dtype).itemsize)

    n_pad = (-n_rows) % block_rows
    if n_pad:
        # Zero rows -> finite (zero) output; sliced off below.
        x2d = jnp.pad(x2d, ((0, n_pad), (0, 0)))
    n_rows_p = n_rows + n_pad

    out = pl.pallas_call(
        functools.partial(_bias_free_ln_kernel, eps=float(eps)),
        grid=(n_rows_p // block_rows,),
        in_specs=[
            pl.BlockSpec((block_rows, C), lambda i: (i, 0)),  # row strip, pipelined
            pl.BlockSpec((1, C), lambda i: (0, 0)),           # weight stays VMEM-resident
        ],
        out_specs=pl.BlockSpec((block_rows, C), lambda i: (i, 0)),
        out_shape=jax.ShapeDtypeStruct((n_rows_p, C), x.dtype),
        compiler_params=pltpu.CompilerParams(dimension_semantics=("parallel",)),
    )(x2d, w2d)

    if n_pad:
        out = out[:n_rows]
    return out.reshape(*lead, C)


# -----------------------------------------------------------------------------
# Pure-JAX reference (mirrors the PyTorch forward exactly)
# -----------------------------------------------------------------------------
def _reference(x, weight, eps=1e-5):
    x32 = x.astype(jnp.float32)
    mu = jnp.mean(x32, axis=-1, keepdims=True)
    var = jnp.mean((x32 - mu) ** 2, axis=-1, keepdims=True)       # unbiased=False
    return (x32 / jnp.sqrt(var + eps) * weight.astype(jnp.float32)).astype(x.dtype)


# -----------------------------------------------------------------------------
if __name__ == "__main__":
    key = jax.random.PRNGKey(0)
    kx1, kx2, kw1, kw2 = jax.random.split(key, 4)

    fwd = jax.jit(bias_free_layernorm)

    # Case 1: token layout (B, H*W, C) with a lane-dense channel dim.
    B, T, C = 2, 64, 128
    x = jax.random.normal(kx1, (B, T, C), dtype=jnp.float32)
    w = 1.0 + 0.1 * jax.random.normal(kw1, (C,), dtype=jnp.float32)
    out = jax.block_until_ready(fwd(x, w))
    assert out.shape == x.shape
    assert float(jnp.max(jnp.abs(out - _reference(x, w)))) < 1e-3

    # Case 2: ragged row count (exercises the row-padding path) and narrow C.
    B2, T2, C2 = 2, 50, 64
    x2 = jax.random.normal(kx2, (B2, T2, C2), dtype=jnp.float32)
    w2 = 1.0 + 0.1 * jax.random.normal(kw2, (C2,), dtype=jnp.float32)
    out2 = jax.block_until_ready(fwd(x2, w2))
    assert out2.shape == x2.shape
    assert float(jnp.max(jnp.abs(out2 - _reference(x2, w2)))) < 1e-3

    print("KERNEL_OK")
</pallas_src>

<mosaic_0001>
module attributes {stable_mosaic.version = 11 : i64} {
  func.func @_bias_free_ln_kernel(%arg0: i32, %arg1: memref<64x128xf32, #tpu.memory_space<vmem>>, %arg2: memref<1x128xf32, #tpu.memory_space<vmem>>, %arg3: memref<64x128xf32, #tpu.memory_space<vmem>>) attributes {dimension_semantics = [#tpu.dimension_semantics<parallel>], iteration_bounds = array<i64: 2>, scalar_prefetch = 0 : i64, scratch_operands = 0 : i64, tpu.core_type = #tpu.core_type<tc>, window_params = [{transform_indices = @transform_0, window_bounds = array<i64: 64, 128>}, {pipeline_mode = #tpu.pipeline_mode<synchronous>, transform_indices = @transform_1, window_bounds = array<i64: 1, 128>}, {transform_indices = @transform_2, window_bounds = array<i64: 64, 128>}]} {
    %c0 = arith.constant 0 : index
    %c0_0 = arith.constant 0 : index
    %0 = vector.load %arg1[%c0, %c0_0] : memref<64x128xf32, #tpu.memory_space<vmem>>, vector<64x128xf32>
    %cst = arith.constant dense<0.000000e+00> : vector<64xf32>
    %1 = vector.multi_reduction <add>, %0, %cst [1] : vector<64x128xf32> to vector<64xf32>
    %2 = vector.shape_cast %1 : vector<64xf32> to vector<64x1xf32>
    %cst_1 = arith.constant 1.280000e+02 : f32
    %3 = vector.broadcast %cst_1 : f32 to vector<64x1xf32>
    %4 = arith.divf %2, %3 : vector<64x1xf32>
    %5 = vector.broadcast %4 : vector<64x1xf32> to vector<64x128xf32>
    %6 = arith.subf %0, %5 : vector<64x128xf32>
    %7 = arith.mulf %6, %6 : vector<64x128xf32>
    %cst_2 = arith.constant dense<0.000000e+00> : vector<64xf32>
    %8 = vector.multi_reduction <add>, %7, %cst_2 [1] : vector<64x128xf32> to vector<64xf32>
    %9 = vector.shape_cast %8 : vector<64xf32> to vector<64x1xf32>
    %cst_3 = arith.constant 1.280000e+02 : f32
    %10 = vector.broadcast %cst_3 : f32 to vector<64x1xf32>
    %11 = arith.divf %9, %10 : vector<64x1xf32>
    %cst_4 = arith.constant 9.99999974E-6 : f32
    %12 = vector.broadcast %cst_4 : f32 to vector<64x1xf32>
    %13 = arith.addf %11, %12 : vector<64x1xf32>
    %14 = math.rsqrt %13 : vector<64x1xf32>
    %15 = vector.broadcast %14 : vector<64x1xf32> to vector<64x128xf32>
    %16 = arith.mulf %0, %15 : vector<64x128xf32>
    %c0_5 = arith.constant 0 : index
    %c0_6 = arith.constant 0 : index
    %17 = vector.load %arg2[%c0_5, %c0_6] : memref<1x128xf32, #tpu.memory_space<vmem>>, vector<1x128xf32>
    %18 = vector.broadcast %17 : vector<1x128xf32> to vector<64x128xf32>
    %19 = arith.mulf %16, %18 : vector<64x128xf32>
    %c0_7 = arith.constant 0 : index
    %c0_8 = arith.constant 0 : index
    %20 = vector.load %arg3[%c0_7, %c0_8] : memref<64x128xf32, #tpu.memory_space<vmem>>, vector<64x128xf32>
    tpu.vector_store %arg3[%c0_7, %c0_8], %19 {strides = array<i32>} : memref<64x128xf32, #tpu.memory_space<vmem>>, vector<64x128xf32>,
    return
  }
  func.func @transform_0(%arg0: i32) -> (i32, i32) {
    %c0_i32 = arith.constant 0 : i32
    %c0_i32_0 = arith.constant 0 : i32
    return %arg0, %c0_i32 : i32, i32
  }
  func.func @transform_1(%arg0: i32) -> (i32, i32) {
    %c0_i32 = arith.constant 0 : i32
    %c0_i32_0 = arith.constant 0 : i32
    %c0_i32_1 = arith.constant 0 : i32
    return %c0_i32, %c0_i32_0 : i32, i32
  }
  func.func @transform_2(%arg0: i32) -> (i32, i32) {
    %c0_i32 = arith.constant 0 : i32
    %c0_i32_0 = arith.constant 0 : i32
    return %arg0, %c0_i32 : i32, i32
  }
}

</mosaic_0001>

<llo_original>
// kernel: bias_free_layernorm.1
$region0: #{bias_free_layernorm.1}
  #allocation0 [shape = 'u32[]', space=smem, size = 0x4, offset = 0x4, fixed_abs, tag = 'smem constant byte address 0x4 - core index']
  #allocation1 [shape = 'u32[72,128]{1,0:T(1,128)}', space=vmem, size = 0x9000, scoped, tag = 'internal scratch']
  %s0 = inlined_call_operand.hbm [shape: f32[128,128], index: 0, kind: input, shape index: {}]
  %s1 = inlined_call_operand.vmem [shape: f32[1,128], index: 1, kind: input, shape index: {}]
  %s2 = inlined_call_operand.hbm [shape: f32[128,128], index: 2, kind: output, shape index: {}]
  %s3 = sld [smem:[#allocation0]]
  $region45: #{bias_free_layernorm.1} parent=0
    _
  %s5 = ssub.s32 1, %s3
  %s6 = scalar_select 0, %s5, %s3
  $region1: #{bias_free_layernorm.1} parent=0
    #allocation2 [shape = 'u8[65536]{0}', space=vmem, size = 0x10000, scoped, tag = 'input window, operand 0']
    #allocation3 [shape = 's32[2]{0}', space=sflag, size = 0x8, scoped, tag = 'scoped memory for bias_free_layernorm.1']
    #allocation4 [shape = 's32[2]{0}', space=sflag, size = 0x8, scoped, tag = 'scoped memory for bias_free_layernorm.1']
    #allocation5 [shape = 'u8[65536]{0}', space=vmem, size = 0x10000, scoped, tag = 'output window, operand 0']
    %7 = vsyncpa [#allocation3], 0
    %s8 = scalar_lea.sflag [#allocation3], 1
    %9 = vsyncpa %s8, 0
    %10 = vsyncpa [#allocation4], 0
    %s11 = scalar_lea.sflag [#allocation4], 1
    %12 = vsyncpa %s11, 0
    loop: start=0, step=1, limit=4
    $region2: #{bias_free_layernorm.1} parent=1 // loop_pre_header
      _
    $region3: #{bias_free_layernorm.1} parent=1 // loop_header
      %s14 = sphi 0, %s18
      %p15 = scmp.ge.s32.totalorder %s14, 4
      %s24 = sphi 0, %s26
      %s27 = sphi 0, %s24
      %s28 = sphi 0, %s27
      %s44 = sphi 0, %s28
      %s48 = sphi 0, %s48
      %s50 = sphi 0, %s48
      %s51 = sphi 0, %s50
      %s65 = sphi 0, %s51
      %s71 = sphi 0, %s73
      %s74 = sphi 0, %s71
      %s75 = sphi 0, %s74
      %s91 = sphi 0, %s75
    $region4: #{bias_free_layernorm.1} parent=1 // loop_header_branch
      %17 = sbr.rel (%p15) target = $region8
    $region5: #{bias_free_layernorm.1} parent=1 // loop_body
      %s19 = ssub.s32 %s14, 1
      %s20 = ssub.s32 %s14, 2
      %s21 = sadd.s32 %s14, 1
      %s22 = ssub.s32 %s14, %s21
      %p23 = scmp.eq.s32.totalorder %s22, 0
      %s25 = sadd.s32 %s24, 1
      %s26 = scalar_select %p23, %s24, %s25
      %p29 = pneg %p23
      %p30 = scmp.eq.s32.totalorder %s14, 1
      %p31 = por %p29, %p30
      %p32 = scmp.ne.s32.totalorder %s24, %s27
      %p33 = scmp.eq.s32.totalorder %s14, 0
      %p34 = por %p32, %p33
      %p35 = scmp.ne.s32.totalorder %s24, %s27
      %p36 = scmp.eq.s32.totalorder %s19, 1
      %p37 = por %p35, %p36
      %p38 = scmp.ne.s32.totalorder %s27, %s28
      %p39 = scmp.eq.s32.totalorder %s19, 0
      %p40 = por %p38, %p39
      %p41 = scmp.ne.s32.totalorder %s27, %s28
      %p42 = scmp.eq.s32.totalorder %s20, 1
      %p43 = por %p41, %p42
      %p45 = scmp.ne.s32.totalorder %s28, %s44
      %p46 = scmp.eq.s32.totalorder %s20, 0
      %p47 = por %p45, %p46
      %s49 = sadd.s32 %s48, 1
      %p52 = scmp.eq.s32.totalorder %s14, 1
      %p53 = scmp.ne.s32.totalorder %s48, %s50
      %p54 = scmp.eq.s32.totalorder %s14, 0
      %p55 = por %p53, %p54
      %p56 = scmp.ne.s32.totalorder %s48, %s50
      %p57 = scmp.eq.s32.totalorder %s19, 1
      %p58 = por %p56, %p57
      %p59 = scmp.ne.s32.totalorder %s50, %s51
      %p60 = scmp.eq.s32.totalorder %s19, 0
      %p61 = por %p59, %p60
      %p62 = scmp.ne.s32.totalorder %s50, %s51
      %p63 = scmp.eq.s32.totalorder %s20, 1
      %p64 = por %p62, %p63
      %p66 = scmp.ne.s32.totalorder %s51, %s65
      %p67 = scmp.eq.s32.totalorder %s20, 0
      %p68 = por %p66, %p67
      %s69 = ssub.s32 %s14, %s21
      %p70 = scmp.eq.s32.totalorder %s69, 0
      %s72 = sadd.s32 %s71, 1
      %s73 = scalar_select %p70, %s71, %s72
      %p76 = pneg %p70
      %p77 = scmp.eq.s32.totalorder %s14, 1
      %p78 = por %p76, %p77
      %p79 = scmp.ne.s32.totalorder %s71, %s74
      %p80 = scmp.eq.s32.totalorder %s14, 0
      %p81 = por %p79, %p80
      %p82 = scmp.ne.s32.totalorder %s71, %s74
      %p83 = scmp.eq.s32.totalorder %s19, 1
      %p84 = por %p82, %p83
      %p85 = scmp.ne.s32.totalorder %s74, %s75
      %p86 = scmp.eq.s32.totalorder %s19, 0
      %p87 = por %p85, %p86
      %p88 = scmp.ne.s32.totalorder %s74, %s75
      %p89 = scmp.eq.s32.totalorder %s20, 1
      %p90 = por %p88, %p89
      %p92 = scmp.ne.s32.totalorder %s75, %s91
      %p93 = scmp.eq.s32.totalorder %s20, 0
      %p94 = por %p92, %p93
      %p95 = scmp.le.s32.totalorder 1, %s14
      %p96 = scmp.lt.s32.totalorder %s14, 3
      %p97 = pnand %p95, %p96
      %p98 = pneg %p97
      // Predicated region
      $region9: #{bias_free_layernorm.1} parent=5 // pred_check
        _
      $region10: #{bias_free_layernorm.1} parent=5 // pred_check_branch
        %100 = sbr.rel (%p97) target = $region12
      $region11: #{bias_free_layernorm.1} parent=5 // pred_region
        %s101 = ssub.s32 %s14, 1
        // Predicated region
        $region13: #{bias_free_layernorm.1} parent=11 // pred_check
          %p102 = pneg %p61
        $region14: #{bias_free_layernorm.1} parent=11 // pred_check_branch
          %104 = sbr.rel (%p102) target = $region16
        $region15: #{bias_free_layernorm.1} parent=11 // pred_region
          _
        $region16: #{bias_free_layernorm.1} parent=11 // pred_fallthru
          _
      $region12: #{bias_free_layernorm.1} parent=5 // pred_fallthru
        _
      %p105 = scmp.lt.s32.totalorder %s14, 2
      // Predicated region
      $region17: #{bias_free_layernorm.1} parent=5 // pred_check
        %p106 = pneg %p105
      $region18: #{bias_free_layernorm.1} parent=5 // pred_check_branch
        %108 = sbr.rel (%p106) target = $region20
      $region19: #{bias_free_layernorm.1} parent=5 // pred_region
        // Predicated region
        $region21: #{bias_free_layernorm.1} parent=19 // pred_check
          %p109 = pneg %p34
        $region22: #{bias_free_layernorm.1} parent=19 // pred_check_branch
          %111 = sbr.rel (%p109) target = $region24
        $region23: #{bias_free_layernorm.1} parent=19 // pred_region
          %s112 = sand.u32 %s24, 1
          %s113 = scalar_lea.sflag [#allocation3], %s112
          %s114 = sand.u32 %s24, 1
          %s115 = smul.addr %s114, 64
          %s116 = scalar_lea.vmem [#allocation2], %s115
          %s117 = smul.u32 8, %s14
          %119 = vsyncadd %s113, 0
          %s120 = smul.addr %s117, 8
          %s121 = scalar_lea.hbm %s0, %s120
          %s122 = sshll.u32 %s121, 4
          %s123 = int_to_ptr.hbm [resolvable:$true] %s122
          %s124 = sshll.u32 %s116, 4
          %s125 = int_to_ptr.vmem [resolvable:$true] %s124
          %130 = dma.hbm_to_vmem [thread:$0]  %s123, 1024, %s125, %s113, 128, 128, 8
        $region24: #{bias_free_layernorm.1} parent=19 // pred_fallthru
          _
      $region20: #{bias_free_layernorm.1} parent=5 // pred_fallthru
        _
      %p131 = scmp.le.s32.totalorder 1, %s14
      %p132 = scmp.lt.s32.totalorder %s14, 3
      %p133 = pnand %p131, %p132
      %p134 = pneg %p133
      // Predicated region
      $region25: #{bias_free_layernorm.1} parent=5 // pred_check
        _
      $region26: #{bias_free_layernorm.1} parent=5 // pred_check_branch
        %136 = sbr.rel (%p133) target = $region28
      $region27: #{bias_free_layernorm.1} parent=5 // pred_region
        %s137 = ssub.s32 %s14, 1
        %s138 = sand.u32 %s27, 1
        %s139 = scalar_lea.sflag [#allocation3], %s138
        %s140 = sand.u32 %s27, 1
        %s141 = smul.addr %s140, 64
        %s142 = scalar_lea.vmem [#allocation2], %s141
        // Predicated region
        $region29: #{bias_free_layernorm.1} parent=27 // pred_check
          %p143 = pneg %p40
        $region30: #{bias_free_layernorm.1} parent=27 // pred_check_branch
          %145 = sbr.rel (%p143) target = $region32
        $region31: #{bias_free_layernorm.1} parent=27 // pred_region
          %147 = dma.done %s139, 1024
        $region32: #{bias_free_layernorm.1} parent=27 // pred_fallthru
          _
        %s148 = sand.u32 %s27, 1
        %s149 = scalar_lea.sflag [#allocation3], %s148
        %s150 = sand.u32 %s27, 1
        %s151 = smul.addr %s150, 64
        %s152 = scalar_lea.vmem [#allocation2], %s151
        %p153 = pneg %p40
        %p154 = pneg %p37
        %p155 = pneg %p61
        %p156 = pneg %p58
        %p157 = pneg %p87
        %p158 = pneg %p84
        %s159 = sand.u32 %s74, 1
        %s160 = scalar_lea.sflag [#allocation4], %s159
        %s161 = sand.u32 %s74, 1
        %s162 = smul.addr %s161, 64
        %s163 = scalar_lea.vmem [#allocation5], %s162
        %s164 = smul.u32 8, %s19
        %s165 = smul.u32 8, %s19
        %v166 = vld [vmem:[%s142] sm:$0xff]
        %v167 = vld [vmem:[%s142 + $0x8] sm:$0xff]
        %v168 = vld [vmem:[%s142 + $0x10] sm:$0xff]
        %v169 = vld [vmem:[%s142 + $0x18] sm:$0xff]
        %v170 = vld [vmem:[%s142 + $0x20] sm:$0xff]
        %v171 = vld [vmem:[%s142 + $0x28] sm:$0xff]
        %v172 = vld [vmem:[%s142 + $0x30] sm:$0xff]
        %v173 = vld [vmem:[%s142 + $0x38] sm:$0xff]
        %174 = vadd.xlane.f32.xlu0 %v166
        %v175 = vpop.xlane.xlu0 %174
        %176 = vadd.xlane.f32.xlu0 %v167
        %v177 = vpop.xlane.xlu0 %176
        %178 = vadd.xlane.f32.xlu0 %v168
        %v179 = vpop.xlane.xlu0 %178
        %180 = vadd.xlane.f32.xlu0 %v169
        %v181 = vpop.xlane.xlu0 %180
        %182 = vadd.xlane.f32.xlu0 %v170
        %v183 = vpop.xlane.xlu0 %182
        %184 = vadd.xlane.f32.xlu0 %v171
        %v185 = vpop.xlane.xlu0 %184
        %186 = vadd.xlane.f32.xlu0 %v172
        %v187 = vpop.xlane.xlu0 %186
        %188 = vadd.xlane.f32.xlu0 %v173
        %v189 = vpop.xlane.xlu0 %188
        %v190 = vrcp.pop 128.0
        %v191 = vmul.f32 128.0, %v190
        %v192 = vsub.f32 1.0, %v191
        %v193 = vmul.f32 %v190, %v192
        %v194 = vadd.f32 %v190, %v193
        %vm195 = vweird.f32 %v190
        %v196 = vsel %vm195, %v190, %v194
        %v197 = vmul.f32 %v175, %v196
        %v198 = vmul.f32 %v177, %v196
        %v199 = vmul.f32 %v179, %v196
        %v200 = vmul.f32 %v181, %v196
        %v201 = vmul.f32 %v183, %v196
        %v202 = vmul.f32 %v185, %v196
        %v203 = vmul.f32 %v187, %v196
        %v204 = vmul.f32 %v189, %v196
        %v205 = vsub.f32 %v166, %v197
        %v206 = vsub.f32 %v167, %v198
        %v207 = vsub.f32 %v168, %v199
        %v208 = vsub.f32 %v169, %v200
        %v209 = vsub.f32 %v170, %v201
        %v210 = vsub.f32 %v171, %v202
        %v211 = vsub.f32 %v172, %v203
        %v212 = vsub.f32 %v173, %v204
        %v213 = vmul.f32 %v205, %v205
        %v214 = vmul.f32 %v206, %v206
        %v215 = vmul.f32 %v207, %v207
        %v216 = vmul.f32 %v208, %v208
        %v217 = vmul.f32 %v209, %v209
        %v218 = vmul.f32 %v210, %v210
        %v219 = vmul.f32 %v211, %v211
        %v220 = vmul.f32 %v212, %v212
        %221 = vadd.xlane.f32.xlu0 %v213
        %v222 = vpop.xlane.xlu0 %221
        %223 = vadd.xlane.f32.xlu0 %v214
        %v224 = vpop.xlane.xlu0 %223
        %225 = vadd.xlane.f32.xlu0 %v215
        %v226 = vpop.xlane.xlu0 %225
        %227 = vadd.xlane.f32.xlu0 %v216
        %v228 = vpop.xlane.xlu0 %227
        %229 = vadd.xlane.f32.xlu0 %v217
        %v230 = vpop.xlane.xlu0 %229
        %231 = vadd.xlane.f32.xlu0 %v218
        %v232 = vpop.xlane.xlu0 %231
        %233 = vadd.xlane.f32.xlu0 %v219
        %v234 = vpop.xlane.xlu0 %233
        %235 = vadd.xlane.f32.xlu0 %v220
        %v236 = vpop.xlane.xlu0 %235
        %v237 = vmul.f32 %v222, %v196
        %v238 = vmul.f32 %v224, %v196
        %v239 = vmul.f32 %v226, %v196
        %v240 = vmul.f32 %v228, %v196
        %v241 = vmul.f32 %v230, %v196
        %v242 = vmul.f32 %v232, %v196
        %v243 = vmul.f32 %v234, %v196
        %v244 = vmul.f32 %v236, %v196
        %v245 = vadd.f32 %v237, 1e-05
        %v246 = vadd.f32 %v238, 1e-05
        %v247 = vadd.f32 %v239, 1e-05
        %v248 = vadd.f32 %v240, 1e-05
        %v249 = vadd.f32 %v241, 1e-05
        %v250 = vadd.f32 %v242, 1e-05
        %v251 = vadd.f32 %v243, 1e-05
        %v252 = vadd.f32 %v244, 1e-05
        %v253 = vrsqrt.pop %v245
        %v254 = vmul.f32 %v253, %v245
        %v255 = vmul.f32 %v254, %v253
        %v256 = vmul.f32 0.5, %v255
        %v257 = vsub.f32 1.5, %v256
        %v258 = vmul.f32 %v253, %v257
        %vm259 = vweird.f32 %v245
        %vm260 = vweird.f32 %v253
        %vm261 = vmor %vm259, %vm260
        %v262 = vsel %vm261, %v253, %v258
        %v263 = vrsqrt.pop %v246
        %v264 = vmul.f32 %v263, %v246
        %v265 = vmul.f32 %v264, %v263
        %v266 = vmul.f32 0.5, %v265
        %v267 = vsub.f32 1.5, %v266
        %v268 = vmul.f32 %v263, %v267
        %vm269 = vweird.f32 %v246
        %vm270 = vweird.f32 %v263
        %vm271 = vmor %vm269, %vm270
        %v272 = vsel %vm271, %v263, %v268
        %v273 = vrsqrt.pop %v247
        %v274 = vmul.f32 %v273, %v247
        %v275 = vmul.f32 %v274, %v273
        %v276 = vmul.f32 0.5, %v275
        %v277 = vsub.f32 1.5, %v276
        %v278 = vmul.f32 %v273, %v277
        %vm279 = vweird.f32 %v247
        %vm280 = vweird.f32 %v273
        %vm281 = vmor %vm279, %vm280
        %v282 = vsel %vm281, %v273, %v278
        %v283 = vrsqrt.pop %v248
        %v284 = vmul.f32 %v283, %v248
        %v285 = vmul.f32 %v284, %v283
        %v286 = vmul.f32 0.5, %v285
        %v287 = vsub.f32 1.5, %v286
        %v288 = vmul.f32 %v283, %v287
        %vm289 = vweird.f32 %v248
        %vm290 = vweird.f32 %v283
        %vm291 = vmor %vm289, %vm290
        %v292 = vsel %vm291, %v283, %v288
        %v293 = vrsqrt.pop %v249
        %v294 = vmul.f32 %v293, %v249
        %v295 = vmul.f32 %v294, %v293
        %v296 = vmul.f32 0.5, %v295
        %v297 = vsub.f32 1.5, %v296
        %v298 = vmul.f32 %v293, %v297
        %vm299 = vweird.f32 %v249
        %vm300 = vweird.f32 %v293
        %vm301 = vmor %vm299, %vm300
        %v302 = vsel %vm301, %v293, %v298
        %v303 = vrsqrt.pop %v250
        %v304 = vmul.f32 %v303, %v250
        %v305 = vmul.f32 %v304, %v303
        %v306 = vmul.f32 0.5, %v305
        %v307 = vsub.f32 1.5, %v306
        %v308 = vmul.f32 %v303, %v307
        %vm309 = vweird.f32 %v250
        %vm310 = vweird.f32 %v303
        %vm311 = vmor %vm309, %vm310
        %v312 = vsel %vm311, %v303, %v308
        %v313 = vrsqrt.pop %v251
        %v314 = vmul.f32 %v313, %v251
        %v315 = vmul.f32 %v314, %v313
        %v316 = vmul.f32 0.5, %v315
        %v317 = vsub.f32 1.5, %v316
        %v318 = vmul.f32 %v313, %v317
        %vm319 = vweird.f32 %v251
        %vm320 = vweird.f32 %v313
        %vm321 = vmor %vm319, %vm320
        %v322 = vsel %vm321, %v313, %v318
        %v323 = vrsqrt.pop %v252
        %v324 = vmul.f32 %v323, %v252
        %v325 = vmul.f32 %v324, %v323
        %v326 = vmul.f32 0.5, %v325
        %v327 = vsub.f32 1.5, %v326
        %v328 = vmul.f32 %v323, %v327
        %vm329 = vweird.f32 %v252
        %vm330 = vweird.f32 %v323
        %vm331 = vmor %vm329, %vm330
        %v332 = vsel %vm331, %v323, %v328
        %v333 = vmul.f32 %v166, %v262
        %v334 = vmul.f32 %v167, %v272
        %v335 = vmul.f32 %v168, %v282
        %v336 = vmul.f32 %v169, %v292
        %v337 = vmul.f32 %v170, %v302
        %v338 = vmul.f32 %v171, %v312
        %v339 = vmul.f32 %v172, %v322
        %v340 = vmul.f32 %v173, %v332
        %v341 = vld [vmem:[%s1] sm:$0x1]
        %v343 = vperm.slane %v341, 0
        %v345 = vmul.f32 %v333, %v343
        %v346 = vmul.f32 %v334, %v343
        %v347 = vmul.f32 %v335, %v343
        %v348 = vmul.f32 %v336, %v343
        %v349 = vmul.f32 %v337, %v343
        %v350 = vmul.f32 %v338, %v343
        %v351 = vmul.f32 %v339, %v343
        %v352 = vmul.f32 %v340, %v343
        %353 = vst [vmem:[%s163] sm:$0xff] %v345
        %354 = vst [vmem:[%s163 + $0x8] sm:$0xff] %v346
        %355 = vst [vmem:[%s163 + $0x10] sm:$0xff] %v347
        %356 = vst [vmem:[%s163 + $0x18] sm:$0xff] %v348
        %357 = vst [vmem:[%s163 + $0x20] sm:$0xff] %v349
        %358 = vst [vmem:[%s163 + $0x28] sm:$0xff] %v350
        %359 = vst [vmem:[%s163 + $0x30] sm:$0xff] %v351
        %360 = vst [vmem:[%s163 + $0x38] sm:$0xff] %v352
        %s361 = sand.u32 %s74, 1
        %s362 = scalar_lea.sflag [#allocation4], %s361
        %s363 = sand.u32 %s74, 1
        %s364 = smul.addr %s363, 64
        %s365 = scalar_lea.vmem [#allocation5], %s364
        // Predicated region
        $region33: #{bias_free_layernorm.1} parent=27 // pred_check
          %p366 = pneg %p84
        $region34: #{bias_free_layernorm.1} parent=27 // pred_check_branch
          %368 = sbr.rel (%p366) target = $region36
        $region35: #{bias_free_layernorm.1} parent=27 // pred_region
          %s369 = smul.u32 8, %s19
          %371 = vsyncadd %s362, 0
          %s372 = smul.addr %s369, 8
          %s373 = scalar_lea.hbm %s2, %s372
          %s374 = sshll.u32 %s365, 4
          %s375 = int_to_ptr.vmem [resolvable:$true] %s374
          %s376 = sshll.u32 %s373, 4
          %s377 = int_to_ptr.hbm [resolvable:$true] %s376
          %382 = dma.vmem_to_hbm [thread:$0]  %s375, 1024, %s377, %s362, 128, 128, 8
        $region36: #{bias_free_layernorm.1} parent=27 // pred_fallthru
          _
      $region28: #{bias_free_layernorm.1} parent=5 // pred_fallthru
        _
      %p383 = scmp.le.s32.totalorder 2, %s14
      // Predicated region
      $region37: #{bias_free_layernorm.1} parent=5 // pred_check
        %p384 = pneg %p383
      $region38: #{bias_free_layernorm.1} parent=5 // pred_check_branch
        %386 = sbr.rel (%p384) target = $region40
      $region39: #{bias_free_layernorm.1} parent=5 // pred_region
        %s387 = ssub.s32 %s14, 2
        // Predicated region
        $region41: #{bias_free_layernorm.1} parent=39 // pred_check
          %p388 = pneg %p90
        $region42: #{bias_free_layernorm.1} parent=39 // pred_check_branch
          %390 = sbr.rel (%p388) target = $region44
        $region43: #{bias_free_layernorm.1} parent=39 // pred_region
          %s391 = sand.u32 %s75, 1
          %s392 = scalar_lea.sflag [#allocation4], %s391
          %s393 = sand.u32 %s75, 1
          %s394 = smul.addr %s393, 64
          %s395 = scalar_lea.vmem [#allocation5], %s394
          %397 = dma.done %s392, 1024
        $region44: #{bias_free_layernorm.1} parent=39 // pred_fallthru
          _
      $region40: #{bias_free_layernorm.1} parent=5 // pred_fallthru
        _
    $region6: #{bias_free_layernorm.1} parent=1 // loop_footer
      %s18 = sadd.s32 1, %s14
    $region7: #{bias_free_layernorm.1} parent=1 // loop_footer_branch
      %13 = sbr.rel target = $region3
    $region8: #{bias_free_layernorm.1} parent=1 // loop_exit
      _
    %398 = vsyncpa [#allocation3], 1
    %s399 = scalar_lea.sflag [#allocation3], 1
    %400 = vsyncpa %s399, 1
    %401 = vsyncpa [#allocation4], 1
    %s402 = scalar_lea.sflag [#allocation4], 1
    %403 = vsyncpa %s402, 1

</llo_original>
